<compile_context>
chip_gen: v7x
topology: tpu7x:2x2x1
jax: 0.10.0
libtpu: 0.0.40
codegen_flags: <defaults>
</compile_context>

<pallas_src>
import functools

import jax
import jax.numpy as jnp
from jax.experimental import pallas as pl
from jax.experimental.pallas import tpu as pltpu


def _rup(n, m):
    return ((n + m - 1) // m) * m


def combined_outcome_kernel(x_ref, wg_ref, bg_ref, w12_ref, b12_ref, out_ref, *,
                            num_classes):
    # ---- G: feature = relu(x @ Wg + bg)   (bf16 MXU, f32 accumulate / epilogue) ----
    feat = jnp.dot(x_ref[...], wg_ref[...], preferred_element_type=jnp.float32)
    feat = jnp.maximum(feat + bg_ref[...], 0.0)                      # [TM, H]  f32

    # ---- fused heads: ONE matmul over the packed [H, Np] panel ---------------------
    #   columns [0, C)  -> head-1 logits, columns [C, 2C) -> head-2 logits, rest zero
    y = jnp.dot(feat.astype(w12_ref.dtype), w12_ref[...],
                preferred_element_type=jnp.float32) + b12_ref[...]   # [TM, Np] f32

    tm, np_ = y.shape
    c = num_classes
    col = jax.lax.broadcasted_iota(jnp.int32, (tm, np_), 1)
    m1 = jnp.max(jnp.where(col < c, y, -jnp.inf), axis=-1, keepdims=True)
    m2 = jnp.max(jnp.where((col >= c) & (col < 2 * c), y, -jnp.inf),
                 axis=-1, keepdims=True)

    # Align head-2 logits to columns 0..C-1 (lane rotate on the XLU, off the MXU path)
    y2 = pltpu.roll(y, shift=np_ - c, axis=1)
    sel = jnp.where(m1 >= m2, y, y2)                                 # per-row select

    # Lane-dense store: out width is a multiple of 128, slice start is vreg-aligned.
    out_ref[...] = sel[:, :out_ref.shape[-1]].astype(out_ref.dtype)


def prepare_params(wg, bg, w1, b1, w2, b2, *, compute_dtype=jnp.bfloat16):
    """One-time parameter prep (hoisted out of the per-call forward path).

    Fuses C1/C2 into a single lane-dense [H, Np] panel (Np = rup(2C, 128)), zero-pads
    the spare columns, and casts the MXU operands to the compute dtype.  Biases stay
    f32.  Returns (params_dict, num_classes).
    """
    wg = jnp.asarray(wg, jnp.float32)
    w1 = jnp.asarray(w1, jnp.float32)
    w2 = jnp.asarray(w2, jnp.float32)
    bg = jnp.asarray(bg, jnp.float32).reshape(1, -1)
    b1 = jnp.asarray(b1, jnp.float32).reshape(1, -1)
    b2 = jnp.asarray(b2, jnp.float32).reshape(1, -1)

    h = wg.shape[1]
    c = w1.shape[1]
    np_ = _rup(2 * c, 128)

    w12 = jnp.zeros((h, np_), jnp.float32)
    w12 = w12.at[:, :c].set(w1).at[:, c:2 * c].set(w2)
    b12 = jnp.zeros((1, np_), jnp.float32)
    b12 = b12.at[:, :c].set(b1).at[:, c:2 * c].set(b2)

    params = dict(
        wg=wg.astype(compute_dtype),
        bg=bg,
        w12=w12.astype(compute_dtype),
        b12=b12,
    )
    return params, c


def _choose_tm(batch, block_b):
    # >= 2 grid steps when the batch allows (v7x megacore sharding), last tile mostly
    # full, TM a multiple of 16 (bf16 sublane packing).
    n_steps = max(2, pl.cdiv(batch, block_b))
    tm = _rup(pl.cdiv(batch, n_steps), 16)
    return max(16, min(tm, block_b))


@functools.partial(jax.jit, static_argnames=("num_classes", "block_b", "out_dtype"))
def combined_outcome_forward(x, params, *, num_classes, block_b=1024,
                             out_dtype=jnp.float32):
    wg, bg, w12, b12 = params["wg"], params["bg"], params["w12"], params["b12"]
    b, d_in = x.shape
    h = wg.shape[1]
    np_ = w12.shape[1]
    c = num_classes
    cp = _rup(c, 128)

    tm = _choose_tm(b, block_b)
    bp = _rup(b, tm)
    grid = (bp // tm,)

    # Only per-call prep: cast x to the compute dtype and pad the batch to the tile.
    xc = x.astype(wg.dtype)
    if bp != b:
        xc = jnp.pad(xc, ((0, bp - b), (0, 0)))

    itemsize = jnp.dtype(wg.dtype).itemsize
    out_itemsize = jnp.dtype(out_dtype).itemsize

    # Double-buffered VMEM footprint -> explicit scoped-VMEM budget with headroom.
    vmem_need = 2 * (tm * d_in * itemsize + d_in * h * itemsize + h * 4
                     + h * np_ * itemsize + np_ * 4 + tm * cp * out_itemsize)
    vmem_limit = int(min(128 * 1024 * 1024, max(16 * 1024 * 1024, 2 * vmem_need)))

    flops = 2 * bp * d_in * h + 2 * bp * h * np_
    bytes_accessed = int(xc.size * itemsize + wg.size * itemsize + w12.size * itemsize
                         + bg.size * 4 + b12.size * 4 + bp * cp * out_itemsize)

    kernel = functools.partial(combined_outcome_kernel, num_classes=c)

    out = pl.pallas_call(
        kernel,
        out_shape=jax.ShapeDtypeStruct((bp, cp), out_dtype),
        grid=grid,
        in_specs=[
            pl.BlockSpec((tm, d_in), lambda i: (i, 0)),   # x: tiled over batch
            pl.BlockSpec((d_in, h), lambda i: (0, 0)),    # weights: VMEM-resident,
            pl.BlockSpec((1, h), lambda i: (0, 0)),       #   constant index -> DMA'd once
            pl.BlockSpec((h, np_), lambda i: (0, 0)),
            pl.BlockSpec((1, np_), lambda i: (0, 0)),
        ],
        out_specs=pl.BlockSpec((tm, cp), lambda i: (i, 0)),
        compiler_params=pltpu.CompilerParams(
            dimension_semantics=("parallel",),
            vmem_limit_bytes=vmem_limit),
        cost_estimate=pl.CostEstimate(flops=flops, transcendentals=0,
                                      bytes_accessed=bytes_accessed),
    )(xc, wg, bg, w12, b12)

    return out[:b, :c]


def reference_forward(x, wg, bg, w1, b1, w2, b2, compute_dtype=jnp.bfloat16):
    # Same bf16-in / f32-accumulate numerics as the kernel.
    xc = x.astype(compute_dtype)
    feat = jnp.maximum(
        jnp.dot(xc, wg.astype(compute_dtype),
                preferred_element_type=jnp.float32) + bg.reshape(1, -1), 0.0)
    fc = feat.astype(compute_dtype)
    p1 = jnp.dot(fc, w1.astype(compute_dtype),
                 preferred_element_type=jnp.float32) + b1.reshape(1, -1)
    p2 = jnp.dot(fc, w2.astype(compute_dtype),
                 preferred_element_type=jnp.float32) + b2.reshape(1, -1)
    m1 = jnp.max(p1, axis=-1, keepdims=True)
    m2 = jnp.max(p2, axis=-1, keepdims=True)
    return jnp.where(m1 >= m2, p1, p2)


if __name__ == "__main__":
    B, D_IN, H, C = 8, 32, 32, 16

    key = jax.random.PRNGKey(0)
    kx, kg, kbg, k1, kb1, k2, kb2 = jax.random.split(key, 7)

    x = jax.random.normal(kx, (B, D_IN), dtype=jnp.float32)
    wg = jax.random.normal(kg, (D_IN, H), dtype=jnp.float32) * 0.1
    bg = jax.random.normal(kbg, (1, H), dtype=jnp.float32) * 0.1
    w1 = jax.random.normal(k1, (H, C), dtype=jnp.float32) * 0.1
    b1 = jax.random.normal(kb1, (1, C), dtype=jnp.float32) * 0.1
    w2 = jax.random.normal(k2, (H, C), dtype=jnp.float32) * 0.1
    b2 = jax.random.normal(kb2, (1, C), dtype=jnp.float32) * 0.1

    # One-time init (hoisted parameter prep), then the lean per-call forward.
    params, num_classes = prepare_params(wg, bg, w1, b1, w2, b2)

    out = combined_outcome_forward(x, params, num_classes=num_classes)
    out = jax.block_until_ready(out)

    ref = reference_forward(x, wg, bg, w1, b1, w2, b2)
    assert out.shape == (B, C)
    err = float(jnp.max(jnp.abs(out - ref)))
    assert jnp.allclose(out, ref, atol=1e-3, rtol=1e-3), f"max abs err = {err}"

    print("KERNEL_OK")
</pallas_src>

<mosaic_0001>
module attributes {stable_mosaic.version = 11 : i64} {
  func.func @combined_outcome_kernel(%arg0: i32, %arg1: memref<16x32xbf16, #tpu.memory_space<vmem>>, %arg2: memref<32x32xbf16, #tpu.memory_space<vmem>>, %arg3: memref<1x32xf32, #tpu.memory_space<vmem>>, %arg4: memref<32x128xbf16, #tpu.memory_space<vmem>>, %arg5: memref<1x128xf32, #tpu.memory_space<vmem>>, %arg6: memref<16x128xf32, #tpu.memory_space<vmem>>) attributes {dimension_semantics = [#tpu.dimension_semantics<parallel>], iteration_bounds = array<i64: 1>, scalar_prefetch = 0 : i64, scratch_operands = 0 : i64, tpu.core_type = #tpu.core_type<tc>, window_params = [{transform_indices = @transform_0, window_bounds = array<i64: 16, 32>}, {pipeline_mode = #tpu.pipeline_mode<synchronous>, transform_indices = @transform_1, window_bounds = array<i64: 32, 32>}, {pipeline_mode = #tpu.pipeline_mode<synchronous>, transform_indices = @transform_2, window_bounds = array<i64: 1, 32>}, {pipeline_mode = #tpu.pipeline_mode<synchronous>, transform_indices = @transform_3, window_bounds = array<i64: 32, 128>}, {pipeline_mode = #tpu.pipeline_mode<synchronous>, transform_indices = @transform_4, window_bounds = array<i64: 1, 128>}, {transform_indices = @transform_5, window_bounds = array<i64: 16, 128>}]} {
    %c0 = arith.constant 0 : index
    %c0_0 = arith.constant 0 : index
    %0 = vector.load %arg1[%c0, %c0_0] : memref<16x32xbf16, #tpu.memory_space<vmem>>, vector<16x32xbf16>
    %c0_1 = arith.constant 0 : index
    %c0_2 = arith.constant 0 : index
    %1 = vector.load %arg2[%c0_1, %c0_2] : memref<32x32xbf16, #tpu.memory_space<vmem>>, vector<32x32xbf16>
    %cst = arith.constant dense<0.000000e+00> : vector<16x32xf32>
    %2 = tpu.matmul %0, %1, %cst {dimension_numbers = #tpu.dot_dimension_numbers<[1], [0], [0], [1], [0, 0, 1, 1], [], []>} : vector<16x32xbf16>, vector<32x32xbf16>, vector<16x32xf32> -> vector<16x32xf32>
    %c0_3 = arith.constant 0 : index
    %c0_4 = arith.constant 0 : index
    %3 = vector.load %arg3[%c0_3, %c0_4] : memref<1x32xf32, #tpu.memory_space<vmem>>, vector<1x32xf32>
    %4 = vector.broadcast %3 : vector<1x32xf32> to vector<16x32xf32>
    %5 = arith.addf %2, %4 : vector<16x32xf32>
    %cst_5 = arith.constant 0.000000e+00 : f32
    %6 = vector.broadcast %cst_5 : f32 to vector<16x32xf32>
    %7 = arith.maximumf %5, %6 : vector<16x32xf32>
    %8 = arith.truncf %7 : vector<16x32xf32> to vector<16x32xbf16>
    %c0_6 = arith.constant 0 : index
    %c0_7 = arith.constant 0 : index
    %9 = vector.load %arg4[%c0_6, %c0_7] : memref<32x128xbf16, #tpu.memory_space<vmem>>, vector<32x128xbf16>
    %cst_8 = arith.constant dense<0.000000e+00> : vector<16x128xf32>
    %10 = tpu.matmul %8, %9, %cst_8 {dimension_numbers = #tpu.dot_dimension_numbers<[1], [0], [0], [1], [0, 0, 1, 1], [], []>} : vector<16x32xbf16>, vector<32x128xbf16>, vector<16x128xf32> -> vector<16x128xf32>
    %c0_9 = arith.constant 0 : index
    %c0_10 = arith.constant 0 : index
    %11 = vector.load %arg5[%c0_9, %c0_10] : memref<1x128xf32, #tpu.memory_space<vmem>>, vector<1x128xf32>
    %12 = vector.broadcast %11 : vector<1x128xf32> to vector<16x128xf32>
    %13 = arith.addf %10, %12 : vector<16x128xf32>
    %14 = tpu.iota {dimensions = array<i32: 1>} : vector<16x128xi32>
    %c16_i32 = arith.constant 16 : i32
    %15 = vector.broadcast %c16_i32 : i32 to vector<16x128xi32>
    %16 = arith.cmpi slt, %14, %15 : vector<16x128xi32>
    %cst_11 = arith.constant 0xFF800000 : f32
    %17 = vector.broadcast %cst_11 : f32 to vector<16x128xf32>
    %18 = arith.select %16, %13, %17 : vector<16x128xi1>, vector<16x128xf32>
    %cst_12 = arith.constant dense<0xFF800000> : vector<16xf32>
    %19 = vector.multi_reduction <maximumf>, %18, %cst_12 [1] : vector<16x128xf32> to vector<16xf32>
    %20 = vector.shape_cast %19 : vector<16xf32> to vector<16x1xf32>
    %c16_i32_13 = arith.constant 16 : i32
    %21 = vector.broadcast %c16_i32_13 : i32 to vector<16x128xi32>
    %22 = arith.cmpi sge, %14, %21 : vector<16x128xi32>
    %c32_i32 = arith.constant 32 : i32
    %23 = vector.broadcast %c32_i32 : i32 to vector<16x128xi32>
    %24 = arith.cmpi slt, %14, %23 : vector<16x128xi32>
    %25 = arith.andi %22, %24 : vector<16x128xi1>
    %cst_14 = arith.constant 0xFF800000 : f32
    %26 = vector.broadcast %cst_14 : f32 to vector<16x128xf32>
    %27 = arith.select %25, %13, %26 : vector<16x128xi1>, vector<16x128xf32>
    %cst_15 = arith.constant dense<0xFF800000> : vector<16xf32>
    %28 = vector.multi_reduction <maximumf>, %27, %cst_15 [1] : vector<16x128xf32> to vector<16xf32>
    %29 = vector.shape_cast %28 : vector<16xf32> to vector<16x1xf32>
    %c112_i32 = arith.constant 112 : i32
    %30 = tpu.dynamic_rotate %13 by %c112_i32 dim 1 : vector<16x128xf32>, i32 -> vector<16x128xf32>
    %31 = arith.cmpf oge, %20, %29 : vector<16x1xf32>
    %32 = vector.shape_cast %31 : vector<16x1xi1> to vector<16x1xi1>
    %33 = vector.broadcast %32 : vector<16x1xi1> to vector<16x128xi1>
    %34 = arith.select %33, %13, %30 : vector<16x128xi1>, vector<16x128xf32>
    %c0_16 = arith.constant 0 : index
    %c0_17 = arith.constant 0 : index
    %35 = vector.load %arg6[%c0_16, %c0_17] : memref<16x128xf32, #tpu.memory_space<vmem>>, vector<16x128xf32>
    tpu.vector_store %arg6[%c0_16, %c0_17], %34 {strides = array<i32>} : memref<16x128xf32, #tpu.memory_space<vmem>>, vector<16x128xf32>,
    return
  }
  func.func @transform_0(%arg0: i32) -> (i32, i32) {
    %c0_i32 = arith.constant 0 : i32
    %c0_i32_0 = arith.constant 0 : i32
    return %arg0, %c0_i32 : i32, i32
  }
  func.func @transform_1(%arg0: i32) -> (i32, i32) {
    %c0_i32 = arith.constant 0 : i32
    %c0_i32_0 = arith.constant 0 : i32
    %c0_i32_1 = arith.constant 0 : i32
    return %c0_i32, %c0_i32_0 : i32, i32
  }
  func.func @transform_2(%arg0: i32) -> (i32, i32) {
    %c0_i32 = arith.constant 0 : i32
    %c0_i32_0 = arith.constant 0 : i32
    %c0_i32_1 = arith.constant 0 : i32
    return %c0_i32, %c0_i32_0 : i32, i32
  }
  func.func @transform_3(%arg0: i32) -> (i32, i32) {
    %c0_i32 = arith.constant 0 : i32
    %c0_i32_0 = arith.constant 0 : i32
    %c0_i32_1 = arith.constant 0 : i32
    return %c0_i32, %c0_i32_0 : i32, i32
  }
  func.func @transform_4(%arg0: i32) -> (i32, i32) {
    %c0_i32 = arith.constant 0 : i32
    %c0_i32_0 = arith.constant 0 : i32
    %c0_i32_1 = arith.constant 0 : i32
    return %c0_i32, %c0_i32_0 : i32, i32
  }
  func.func @transform_5(%arg0: i32) -> (i32, i32) {
    %c0_i32 = arith.constant 0 : i32
    %c0_i32_0 = arith.constant 0 : i32
    return %arg0, %c0_i32 : i32, i32
  }
}

</mosaic_0001>

<llo_original>
// kernel: combined_outcome_forward.1
$region0: #{combined_outcome_forward.1}
  #allocation0 [shape = 'u32[]', space=smem, size = 0x4, offset = 0x4, fixed_abs, tag = 'smem constant byte address 0x4 - core index']
  #allocation1 [shape = 'u32[144,128]{1,0:T(1,128)}', space=vmem, size = 0x12000, scoped, tag = 'internal scratch']
  %s0 = inlined_call_operand.vmem [shape: bf16[16,32], index: 0, kind: input, shape index: {}]
  %s1 = inlined_call_operand.vmem [shape: bf16[32,32], index: 1, kind: input, shape index: {}]
  %s2 = inlined_call_operand.hbm [shape: f32[1,32], index: 2, kind: input, shape index: {}]
  %s3 = inlined_call_operand.vmem [shape: bf16[32,128], index: 3, kind: input, shape index: {}]
  %s4 = inlined_call_operand.hbm [shape: f32[1,128], index: 4, kind: input, shape index: {}]
  %s5 = inlined_call_operand.vmem [shape: f32[16,128], index: 5, kind: output, shape index: {}]
  %s6 = sld [smem:[#allocation0]]
  $region38: #{combined_outcome_forward.1} parent=0
    _
  %s8 = ssub.s32 1, %s6
  %s9 = scalar_select 0, %s8, %s6
  $region1: #{combined_outcome_forward.1} parent=0
    #allocation2 [shape = 'u8[512]{0}', space=vmem, size = 0x400, scoped, tag = 'input window, operand 2, single buffered']
    #allocation3 [shape = 's32[1]{0}', space=sflag, size = 0x4, scoped, tag = 'scoped memory for combined_outcome_forward.1']
    #allocation4 [shape = 'u8[512]{0}', space=vmem, size = 0x400, scoped, tag = 'input window, operand 4, single buffered']
    #allocation5 [shape = 's32[1]{0}', space=sflag, size = 0x4, scoped, tag = 'scoped memory for combined_outcome_forward.1']
    %10 = vsyncpa [#allocation3], 0
    %11 = vsyncpa [#allocation5], 0
    // Predicated region
    $region2: #{combined_outcome_forward.1} parent=1 // pred_check
      _
    $region3: #{combined_outcome_forward.1} parent=1 // pred_check_branch
      %13 = sbr.rel (0) target = $region5
    $region4: #{combined_outcome_forward.1} parent=1 // pred_region
      _
    $region5: #{combined_outcome_forward.1} parent=1 // pred_fallthru
      _
    // Predicated region
    $region6: #{combined_outcome_forward.1} parent=1 // pred_check
      _
    $region7: #{combined_outcome_forward.1} parent=1 // pred_check_branch
      %15 = sbr.rel (0) target = $region9
    $region8: #{combined_outcome_forward.1} parent=1 // pred_region
      _
    $region9: #{combined_outcome_forward.1} parent=1 // pred_fallthru
      _
    // Predicated region
    $region10: #{combined_outcome_forward.1} parent=1 // pred_check
      _
    $region11: #{combined_outcome_forward.1} parent=1 // pred_check_branch
      %17 = sbr.rel (0) target = $region13
    $region12: #{combined_outcome_forward.1} parent=1 // pred_region
      %s19 = ssub.s32 16, 16
      %20 = vsyncadd [#allocation3], %s19
      %s22 = sshll.u32 [#allocation2], 4
      %s23 = int_to_ptr.vmem [resolvable:$true] %s22
      %25 = dma.hbm_to_vmem [thread:$0]  %s2, 16, %s23, [#allocation3]
    $region13: #{combined_outcome_forward.1} parent=1 // pred_fallthru
      _
    // Predicated region
    $region14: #{combined_outcome_forward.1} parent=1 // pred_check
      _
    $region15: #{combined_outcome_forward.1} parent=1 // pred_check_branch
      %27 = sbr.rel (0) target = $region17
    $region16: #{combined_outcome_forward.1} parent=1 // pred_region
      _
    $region17: #{combined_outcome_forward.1} parent=1 // pred_fallthru
      _
    // Predicated region
    $region18: #{combined_outcome_forward.1} parent=1 // pred_check
      _
    $region19: #{combined_outcome_forward.1} parent=1 // pred_check_branch
      %29 = sbr.rel (0) target = $region21
    $region20: #{combined_outcome_forward.1} parent=1 // pred_region
      %s31 = ssub.s32 16, 16
      %32 = vsyncadd [#allocation5], %s31
      %s34 = sshll.u32 [#allocation4], 4
      %s35 = int_to_ptr.vmem [resolvable:$true] %s34
      %37 = dma.hbm_to_vmem [thread:$0]  %s4, 16, %s35, [#allocation5]
    $region21: #{combined_outcome_forward.1} parent=1 // pred_fallthru
      _
    // Predicated region
    $region22: #{combined_outcome_forward.1} parent=1 // pred_check
      _
    $region23: #{combined_outcome_forward.1} parent=1 // pred_check_branch
      %39 = sbr.rel (0) target = $region25
    $region24: #{combined_outcome_forward.1} parent=1 // pred_region
      %40 = dma.done [#allocation3], 16
    $region25: #{combined_outcome_forward.1} parent=1 // pred_fallthru
      _
    // Predicated region
    $region26: #{combined_outcome_forward.1} parent=1 // pred_check
      _
    $region27: #{combined_outcome_forward.1} parent=1 // pred_check_branch
      %42 = sbr.rel (0) target = $region29
    $region28: #{combined_outcome_forward.1} parent=1 // pred_region
      %43 = dma.done [#allocation5], 16
    $region29: #{combined_outcome_forward.1} parent=1 // pred_fallthru
      _
    %v45 = vld [vmem:[%s0] sm:$0xf]
    %v46 = vld [vmem:[%s0 + $0x4] sm:$0xf]
    %v47 = vld [vmem:[%s1] sm:$0xf]
    %v48 = vld [vmem:[%s1 + $0x4] sm:$0xf]
    %v49 = vld [vmem:[%s1 + $0x8] sm:$0xf]
    %v50 = vld [vmem:[%s1 + $0xc] sm:$0xf]
    %v51 = vld [vmem:[#allocation2] sm:$0x1]
    %v53 = vlaneseq
    %v54 = vshrl.u32 %v53, 7
    %v55 = vsub.s32 0, %v54
    %v56 = vrot.slane %v51, %v55
    %v60 = vunpack.c.l.b16 %v45
    %v61 = vunpack.c.l.b16 %v46
    %v62 = vpack.c.b16 %v61, %v60
    %v67 = vunpack.c.l.b16 %v47
    %v68 = vunpack.c.l.b16 %v48
    %v69 = vunpack.c.l.b16 %v49
    %v70 = vunpack.c.l.b16 %v50
    %v71 = vpack.c.b16 %v68, %v67
    %v72 = vpack.c.b16 %v70, %v69
    %vm75 = vcmask 261120
    %v77 = vsel %vm75, %v62, 0
    %79 = vmatprep.subr.bf16.mxu0 0
    %80 = vmatpush1.bf16.msra.mxu0 %v71
    %81 = vmatprep.subr.bf16.mxu0 0
    %82 = vmatpush1.bf16.msra.mxu0 %v72
    %83 = vmatprep.subr.bf16.mxu0 0
    %84 = vmatpush1.bf16.msra.mxu0 0
    %85 = vmatprep.subr.bf16.mxu0 0
    %86 = vmatpush1.bf16.msra.mxu0 0
    %87 = vmatprep.subr.bf16.mxu0 0
    %88 = vmatpush1.bf16.msra.mxu0 0
    %89 = vmatprep.subr.bf16.mxu0 0
    %90 = vmatpush1.bf16.msra.mxu0 0
    %91 = vmatprep.subr.bf16.mxu0 0
    %92 = vmatpush1.bf16.msra.mxu0 0
    %93 = vmatprep.subr.bf16.mxu0 0
    %94 = vmatpush1.bf16.msra.mxu0 0
    %95 = vmatprep.subr.bf16.mxu0 0
    %96 = vmatpush1.bf16.msra.mxu0 0
    %97 = vmatprep.subr.bf16.mxu0 0
    %98 = vmatpush1.bf16.msra.mxu0 0
    %99 = vmatprep.subr.bf16.mxu0 0
    %100 = vmatpush1.bf16.msra.mxu0 0
    %101 = vmatprep.subr.bf16.mxu0 0
    %102 = vmatpush1.bf16.msra.mxu0 0
    %103 = vmatprep.subr.bf16.mxu0 0
    %104 = vmatpush1.bf16.msra.mxu0 0
    %105 = vmatprep.subr.bf16.mxu0 0
    %106 = vmatpush1.bf16.msra.mxu0 0
    %107 = vmatprep.subr.bf16.mxu0 0
    %108 = vmatpush1.bf16.msra.mxu0 0
    %109 = vmatprep.subr.bf16.mxu0 0
    %110 = vmatpush1.bf16.msra.mxu0 0
    %111 = vmatprep.mubr.bf16.mxu0 0
    %112 = vmatmul.mubr.bf16.gmra.mrb[0].mxu0 %v77
    %v113 = vpop.f32.mrb[0].mxu0
    %v114 = vadd.f32 %v56, %v113
    %v115 = vpop.f32.mrb[0].mxu0
    %v116 = vpop.f32.mrb[0].mxu0
    %v117 = vadd.f32 %v56, %v116
    %v118 = vpop.f32.mrb[0].mxu0
    %119 = vdwg.mxu0
    %v120 = vmax.f32 %v114, 0.0
    %v121 = vmax.f32 %v117, 0.0
    %v122 = vpack.c.bf16 %v121, %v120
    %v123 = vld [vmem:[%s3] sm:$0xf]
    %v124 = vld [vmem:[%s3 + $0x4] sm:$0xf]
    %v125 = vld [vmem:[%s3 + $0x8] sm:$0xf]
    %v126 = vld [vmem:[%s3 + $0xc] sm:$0xf]
    %v127 = vld [vmem:[#allocation4] sm:$0x1]
    %v129 = vlaneseq
    %v130 = vshrl.u32 %v129, 7
    %v131 = vsub.s32 0, %v130
    %v132 = vrot.slane %v127, %v131
    %v138 = vunpack.c.l.b16 %v123
    %v139 = vunpack.c.l.b16 %v124
    %v140 = vunpack.c.l.b16 %v125
    %v141 = vunpack.c.l.b16 %v126
    %v142 = vpack.c.b16 %v139, %v138
    %v143 = vpack.c.b16 %v141, %v140
    %v147 = vsel %vm75, %v122, 0
    %149 = vmatprep.subr.bf16.mxu0 0
    %150 = vmatpush1.bf16.msra.mxu0 %v142
    %151 = vmatprep.subr.bf16.mxu0 0
    %152 = vmatpush1.bf16.msra.mxu0 %v143
    %153 = vmatprep.subr.bf16.mxu0 0
    %154 = vmatpush1.bf16.msra.mxu0 0
    %155 = vmatprep.subr.bf16.mxu0 0
    %156 = vmatpush1.bf16.msra.mxu0 0
    %157 = vmatprep.subr.bf16.mxu0 0
    %158 = vmatpush1.bf16.msra.mxu0 0
    %159 = vmatprep.subr.bf16.mxu0 0
    %160 = vmatpush1.bf16.msra.mxu0 0
    %161 = vmatprep.subr.bf16.mxu0 0
    %162 = vmatpush1.bf16.msra.mxu0 0
    %163 = vmatprep.subr.bf16.mxu0 0
    %164 = vmatpush1.bf16.msra.mxu0 0
    %165 = vmatprep.subr.bf16.mxu0 0
    %166 = vmatpush1.bf16.msra.mxu0 0
    %167 = vmatprep.subr.bf16.mxu0 0
    %168 = vmatpush1.bf16.msra.mxu0 0
    %169 = vmatprep.subr.bf16.mxu0 0
    %170 = vmatpush1.bf16.msra.mxu0 0
    %171 = vmatprep.subr.bf16.mxu0 0
    %172 = vmatpush1.bf16.msra.mxu0 0
    %173 = vmatprep.subr.bf16.mxu0 0
    %174 = vmatpush1.bf16.msra.mxu0 0
    %175 = vmatprep.subr.bf16.mxu0 0
    %176 = vmatpush1.bf16.msra.mxu0 0
    %177 = vmatprep.subr.bf16.mxu0 0
    %178 = vmatpush1.bf16.msra.mxu0 0
    %179 = vmatprep.subr.bf16.mxu0 0
    %180 = vmatpush1.bf16.msra.mxu0 0
    %181 = vmatprep.mubr.bf16.mxu0 0
    %182 = vmatmul.mubr.bf16.gmra.mrb[0].mxu0 %v147
    %v183 = vpop.f32.mrb[0].mxu0
    %v184 = vadd.f32 %v132, %v183
    %v185 = vpop.f32.mrb[0].mxu0
    %v186 = vpop.f32.mrb[0].mxu0
    %v187 = vadd.f32 %v132, %v186
    %v188 = vpop.f32.mrb[0].mxu0
    %189 = vdwg.mxu0
    %v190 = vlaneseq
    %v191 = vand.u32 %v190, 127
    %vm192 = vcmp.lt.s32.totalorder %v191, 16
    %v193 = vsel %vm192, %v184, -inf
    %v194 = vsel %vm192, %v187, -inf
    %195 = vmax.xlane.f32.xlu0 %v193
    %v196 = vpop.xlane.xlu0 %195
    %197 = vmax.xlane.f32.xlu0 %v194
    %v198 = vpop.xlane.xlu0 %197
    %vm199 = vcmp.ge.s32.totalorder %v191, 16
    %vm200 = vcmp.lt.s32.totalorder %v191, 32
    %vm201 = vmand %vm199, %vm200
    %v202 = vsel %vm201, %v184, -inf
    %v203 = vsel %vm201, %v187, -inf
    %204 = vmax.xlane.f32.xlu0 %v202
    %v205 = vpop.xlane.xlu0 %204
    %206 = vmax.xlane.f32.xlu0 %v203
    %v207 = vpop.xlane.xlu0 %206
    %208 = vrot.lane.b32.xlu0 %v184, 112
    %v209 = vpop.permute.xlu0 %208
    %210 = vrot.lane.b32.xlu0 %v187, 112
    %v211 = vpop.permute.xlu0 %210
    %vm212 = vcmp.ge.f32.partialorder %v196, %v205
    %vm213 = vcmp.ge.f32.partialorder %v198, %v207
    %v214 = vsel %vm212, 1, 0
    %v215 = vsel %vm213, 1, 0
    %vm216 = vcmp.eq.s32.totalorder %v214, 1
    %vm217 = vcmp.eq.s32.totalorder %v215, 1
    %v218 = vsel %vm216, %v184, %v209
    %v219 = vsel %vm217, %v187, %v211
    %220 = vst [vmem:[%s5] sm:$0xff] %v218
    %221 = vst [vmem:[%s5 + $0x8] sm:$0xff] %v219
    // Predicated region
    $region30: #{combined_outcome_forward.1} parent=1 // pred_check
      _
    $region31: #{combined_outcome_forward.1} parent=1 // pred_check_branch
      %223 = sbr.rel (0) target = $region33
    $region32: #{combined_outcome_forward.1} parent=1 // pred_region
      _
    $region33: #{combined_outcome_forward.1} parent=1 // pred_fallthru
      _
    // Predicated region
    $region34: #{combined_outcome_forward.1} parent=1 // pred_check
      _
    $region35: #{combined_outcome_forward.1} parent=1 // pred_check_branch
      %225 = sbr.rel (0) target = $region37
    $region36: #{combined_outcome_forward.1} parent=1 // pred_region
      _
    $region37: #{combined_outcome_forward.1} parent=1 // pred_fallthru
      _
    %226 = vsyncpa [#allocation3], 1
    %227 = vsyncpa [#allocation5], 1

</llo_original>
